<compile_context>
chip_gen: v6e
topology: v6e:2x2x1
jax: 0.10.0
libtpu: 0.0.40
codegen_flags: <defaults>
</compile_context>

<pallas_src>
import functools

import jax
import jax.numpy as jnp
from jax.experimental import pallas as pl
from jax.experimental.pallas import tpu as pltpu


CP = 128  # lane-padded channel dimension


def _round_up(a, b):
    return (a + b - 1) // b * b


# ----------------------------- Pallas kernel --------------------------------
def _fused_tcn_kernel(x_ref, w1_ref, b1_ref, w2_ref, b2_ref, o_ref, h_ref, *,
                      K, stride, dilation, padding, lead, b_tile,
                      l1_out, l2_out):
    """B_TILE batch elements: fused (conv1+bias+ReLU) -> (conv2+bias+ReLU).

    x_ref:  (b_tile, L + 2*padding, CP)  f32, time- and channel-padded input
    w?_ref: (K, CP, CP)                  bf16 per-tap weight matrices
    b?_ref: (1, CP)                      f32 channel-padded bias
    o_ref:  (b_tile, l2_out, CP)         f32 output
    h_ref:  (b_tile, lead + l1_out + padding, CP) f32 VMEM scratch holding the
            time-padded intermediate; the interior lives at rows
            [lead, lead + l1_out) where lead is a multiple of 8 (aligned,
            unmasked stores).  Only the 2*padding boundary rows are zeroed.
    """

    def tap_bf16(ref, start, n_rows):
        # Static *ref* slice -> plain offset vector load (no value-slice
        # shuffles).  Collapse the batch dim into the matmul row dim to feed
        # the MXU a tall LHS; cast to bf16 at the dot (f32 accumulation).
        if stride == 1:
            v = ref[:, start:start + n_rows, :]
        else:
            end = start + (n_rows - 1) * stride + 1
            v = jax.lax.slice(ref[:, start:end, :], (0, 0, 0),
                              (b_tile, end - start, CP), (1, stride, 1))
        return v.reshape(b_tile * n_rows, CP).astype(jnp.bfloat16)

    # ---- layer 1: conv1 as K tall matmuls + bias + ReLU ----
    acc1 = jnp.zeros((b_tile * l1_out, CP), jnp.float32)
    for k in range(K):
        acc1 = acc1 + jnp.dot(tap_bf16(x_ref, k * dilation, l1_out), w1_ref[k],
                              preferred_element_type=jnp.float32)
    h = jnp.maximum(acc1 + b1_ref[...], 0.0)

    # Stage the time-padded intermediate in VMEM (never touches HBM):
    # zero only the boundary rows, write the interior once, aligned.
    if padding > 0:
        zb = jnp.zeros((b_tile, padding, CP), jnp.float32)
        h_ref[:, lead - padding:lead, :] = zb
        h_ref[:, lead + l1_out:lead + l1_out + padding, :] = zb
    h_ref[:, lead:lead + l1_out, :] = h.reshape(b_tile, l1_out, CP)

    # ---- layer 2: conv2 as K tall matmuls + bias + ReLU ----
    acc2 = jnp.zeros((b_tile * l2_out, CP), jnp.float32)
    for k in range(K):
        acc2 = acc2 + jnp.dot(
            tap_bf16(h_ref, lead - padding + k * dilation, l2_out), w2_ref[k],
            preferred_element_type=jnp.float32)
    out = jnp.maximum(acc2 + b2_ref[...], 0.0)

    # The module-level final ReLU is an identity on the already-ReLU'd value.
    o_ref[...] = out.reshape(b_tile, l2_out, CP)


# --------------------------- parameter preparation ---------------------------
def _weight_norm(v, g):
    """v: (C_out, C_in, K), g: (C_out, 1, 1) -> g * v / ||v|| (norm over dims 1,2).

    No epsilon guard, same as PyTorch weight_norm."""
    norm = jnp.sqrt(jnp.sum(v * v, axis=(1, 2), keepdims=True))
    return g * v / norm


def prepare_params(params, *, kernel_size, n_inputs, n_outputs):
    """Hoisted (once per checkpoint): weight_norm + repack to bf16 lane-padded
    per-tap matrices.  Weight HBM/VMEM traffic is halved vs. f32."""
    assert n_inputs <= CP and n_outputs <= CP

    def pack_weight(w, cin, cout):
        # (C_out, C_in, K) -> (K, C_in, C_out) -> zero-pad to (K, CP, CP), bf16
        wk = jnp.transpose(w, (2, 1, 0)).astype(jnp.float32)
        full = jnp.zeros((kernel_size, CP, CP), jnp.float32).at[:, :cin, :cout].set(wk)
        return full.astype(jnp.bfloat16)

    def pack_bias(b, cout):
        return jnp.zeros((1, CP), jnp.float32).at[0, :cout].set(b.astype(jnp.float32))

    w1 = _weight_norm(params["v1"], params["g1"])
    w2 = _weight_norm(params["v2"], params["g2"])
    return dict(
        w1=pack_weight(w1, n_inputs, n_outputs),
        b1=pack_bias(params["b1"], n_outputs),
        w2=pack_weight(w2, n_outputs, n_outputs),
        b2=pack_bias(params["b2"], n_outputs),
    )


# --------------------------------- forward -----------------------------------
@functools.partial(jax.jit, static_argnames=(
    "kernel_size", "stride", "dilation", "padding", "n_outputs"))
def temporal_block_forward(x, prepared, *, kernel_size, stride, dilation,
                           padding, n_outputs):
    """x: (N, C_in, L) -> (N, n_outputs, L2_out)."""
    N, C_in, L = x.shape
    K = kernel_size
    l1_in = L + 2 * padding
    l1_out = (l1_in - dilation * (K - 1) - 1) // stride + 1
    l2_in = l1_out + 2 * padding
    l2_out = (l2_in - dilation * (K - 1) - 1) // stride + 1
    # interior of the padded intermediate starts at an 8-row-aligned offset
    lead = _round_up(padding, 8) if padding > 0 else 0

    # Fold batch into the matmul row dim: aim for >=256 LHS rows per matmul.
    b_tile = max(1, min(N, -(-256 // max(l1_out, 1))))
    n_pad = _round_up(N, b_tile)

    # NCL -> (N_pad, L+2p, CP): time-padded, lane-dense channels-last layout.
    xt = jnp.transpose(x, (0, 2, 1)).astype(jnp.float32)
    xp = jnp.pad(xt, ((0, n_pad - N), (padding, padding), (0, CP - C_in)))

    kernel = functools.partial(
        _fused_tcn_kernel, K=K, stride=stride, dilation=dilation,
        padding=padding, lead=lead, b_tile=b_tile,
        l1_out=l1_out, l2_out=l2_out)

    out = pl.pallas_call(
        kernel,
        out_shape=jax.ShapeDtypeStruct((n_pad, l2_out, CP), jnp.float32),
        grid_spec=pltpu.PrefetchScalarGridSpec(
            num_scalar_prefetch=0,
            grid=(n_pad // b_tile,),
            in_specs=[
                pl.BlockSpec((b_tile, l1_in, CP), lambda n: (n, 0, 0)),
                pl.BlockSpec((K, CP, CP), lambda n: (0, 0, 0)),
                pl.BlockSpec((1, CP), lambda n: (0, 0)),
                pl.BlockSpec((K, CP, CP), lambda n: (0, 0, 0)),
                pl.BlockSpec((1, CP), lambda n: (0, 0)),
            ],
            out_specs=pl.BlockSpec((b_tile, l2_out, CP), lambda n: (n, 0, 0)),
            scratch_shapes=[
                pltpu.VMEM((b_tile, lead + l1_out + padding, CP), jnp.float32)],
        ),
        # Batch tiles are independent -> "parallel" (2 TensorCores on v7x;
        # no-op on single-core v5e/v6e).
        compiler_params=pltpu.CompilerParams(dimension_semantics=("parallel",)),
    )(xp, prepared["w1"], prepared["b1"], prepared["w2"], prepared["b2"])

    out = out[:N, :, :n_outputs]              # drop batch + lane zero padding
    return jnp.transpose(out, (0, 2, 1))      # back to (N, C_out, L2_out)


# --------------------------------- main --------------------------------------
if __name__ == "__main__":
    # Module hyperparameters (small, consistent with the forward).
    n_inputs, n_outputs = 4, 8
    kernel_size, stride, dilation, padding, dropout = 3, 1, 1, 1, 0.0

    N, L = 2, 16  # batch, sequence length

    key = jax.random.PRNGKey(0)
    k_x, k_v1, k_g1, k_b1, k_v2, k_g2, k_b2 = jax.random.split(key, 7)

    x = jax.random.normal(k_x, (N, n_inputs, L), dtype=jnp.float32)

    # weight_norm stores v and g; effective weight is g * v / ||v||.
    v1 = 0.01 * jax.random.normal(k_v1, (n_outputs, n_inputs, kernel_size), jnp.float32)
    g1 = jnp.abs(jax.random.normal(k_g1, (n_outputs, 1, 1), jnp.float32)) + 0.5
    b1 = 0.1 * jax.random.normal(k_b1, (n_outputs,), jnp.float32)
    v2 = 0.01 * jax.random.normal(k_v2, (n_outputs, n_outputs, kernel_size), jnp.float32)
    g2 = jnp.abs(jax.random.normal(k_g2, (n_outputs, 1, 1), jnp.float32)) + 0.5
    b2 = 0.1 * jax.random.normal(k_b2, (n_outputs,), jnp.float32)

    params = dict(v1=v1, g1=g1, b1=b1, v2=v2, g2=g2, b2=b2)
    prepared = prepare_params(params, kernel_size=kernel_size,
                              n_inputs=n_inputs, n_outputs=n_outputs)

    out = temporal_block_forward(x, prepared, kernel_size=kernel_size,
                                 stride=stride, dilation=dilation,
                                 padding=padding, n_outputs=n_outputs)
    out = jax.block_until_ready(out)

    # Plain-JAX reference with the same bf16 quantization points as the kernel
    # (weights bf16, MXU LHS bf16, f32 accumulation).
    def conv_relu(xv, w, b):
        y = jax.lax.conv_general_dilated(
            xv, w, window_strides=(stride,), padding=[(padding, padding)],
            rhs_dilation=(dilation,),
            dimension_numbers=("NCH", "OIH", "NCH"),
            precision=jax.lax.Precision.HIGHEST)
        return jnp.maximum(y + b[None, :, None], 0.0)

    def q(a):  # bf16 round-trip (what the kernel feeds the MXU)
        return a.astype(jnp.bfloat16).astype(jnp.float32)

    w1_eff = q(_weight_norm(v1, g1))
    w2_eff = q(_weight_norm(v2, g2))
    h1 = q(conv_relu(q(x), w1_eff, b1))
    ref = jnp.maximum(conv_relu(h1, w2_eff, b2), 0.0)

    assert out.shape == ref.shape, (out.shape, ref.shape)
    assert jnp.allclose(out, ref, atol=2e-3, rtol=2e-3), \
        float(jnp.max(jnp.abs(out - ref)))

    print("KERNEL_OK")
</pallas_src>

<mosaic_0001>
module attributes {stable_mosaic.version = 11 : i64} {
  func.func @_fused_tcn_kernel(%arg0: i32, %arg1: memref<2x18x128xf32, #tpu.memory_space<vmem>>, %arg2: memref<3x128x128xbf16, #tpu.memory_space<vmem>>, %arg3: memref<1x128xf32, #tpu.memory_space<vmem>>, %arg4: memref<3x128x128xbf16, #tpu.memory_space<vmem>>, %arg5: memref<1x128xf32, #tpu.memory_space<vmem>>, %arg6: memref<2x16x128xf32, #tpu.memory_space<vmem>>, %arg7: memref<2x25x128xf32, #tpu.memory_space<vmem>>) attributes {dimension_semantics = [#tpu.dimension_semantics<parallel>], iteration_bounds = array<i64: 1>, scalar_prefetch = 0 : i64, scratch_operands = 1 : i64, tpu.core_type = #tpu.core_type<tc>, window_params = [{transform_indices = @transform_0, window_bounds = array<i64: 2, 18, 128>}, {pipeline_mode = #tpu.pipeline_mode<synchronous>, transform_indices = @transform_1, window_bounds = array<i64: 3, 128, 128>}, {pipeline_mode = #tpu.pipeline_mode<synchronous>, transform_indices = @transform_2, window_bounds = array<i64: 1, 128>}, {pipeline_mode = #tpu.pipeline_mode<synchronous>, transform_indices = @transform_3, window_bounds = array<i64: 3, 128, 128>}, {pipeline_mode = #tpu.pipeline_mode<synchronous>, transform_indices = @transform_4, window_bounds = array<i64: 1, 128>}, {transform_indices = @transform_5, window_bounds = array<i64: 2, 16, 128>}]} {
    %cst = arith.constant 0.000000e+00 : f32
    %0 = vector.broadcast %cst : f32 to vector<32x128xf32>
    %c0 = arith.constant 0 : index
    %c0_0 = arith.constant 0 : index
    %c0_1 = arith.constant 0 : index
    %1 = vector.load %arg1[%c0, %c0_0, %c0_1] : memref<2x18x128xf32, #tpu.memory_space<vmem>>, vector<2x16x128xf32>
    %2 = vector.shape_cast %1 : vector<2x16x128xf32> to vector<32x128xf32>
    %3 = arith.truncf %2 : vector<32x128xf32> to vector<32x128xbf16>
    %c0_2 = arith.constant 0 : index
    %c0_3 = arith.constant 0 : index
    %c0_4 = arith.constant 0 : index
    %4 = vector.load %arg2[%c0_2, %c0_3, %c0_4] : memref<3x128x128xbf16, #tpu.memory_space<vmem>>, vector<1x128x128xbf16>
    %5 = vector.shape_cast %4 : vector<1x128x128xbf16> to vector<128x128xbf16>
    %cst_5 = arith.constant dense<0.000000e+00> : vector<32x128xf32>
    %6 = tpu.matmul %3, %5, %cst_5 {dimension_numbers = #tpu.dot_dimension_numbers<[1], [0], [0], [1], [0, 0, 1, 1], [], []>} : vector<32x128xbf16>, vector<128x128xbf16>, vector<32x128xf32> -> vector<32x128xf32>
    %7 = arith.addf %0, %6 : vector<32x128xf32>
    %c0_6 = arith.constant 0 : index
    %c1 = arith.constant 1 : index
    %c0_7 = arith.constant 0 : index
    %8 = vector.load %arg1[%c0_6, %c1, %c0_7] : memref<2x18x128xf32, #tpu.memory_space<vmem>>, vector<2x16x128xf32>
    %9 = vector.shape_cast %8 : vector<2x16x128xf32> to vector<32x128xf32>
    %10 = arith.truncf %9 : vector<32x128xf32> to vector<32x128xbf16>
    %c1_8 = arith.constant 1 : index
    %c0_9 = arith.constant 0 : index
    %c0_10 = arith.constant 0 : index
    %11 = vector.load %arg2[%c1_8, %c0_9, %c0_10] : memref<3x128x128xbf16, #tpu.memory_space<vmem>>, vector<1x128x128xbf16>
    %12 = vector.shape_cast %11 : vector<1x128x128xbf16> to vector<128x128xbf16>
    %cst_11 = arith.constant dense<0.000000e+00> : vector<32x128xf32>
    %13 = tpu.matmul %10, %12, %cst_11 {dimension_numbers = #tpu.dot_dimension_numbers<[1], [0], [0], [1], [0, 0, 1, 1], [], []>} : vector<32x128xbf16>, vector<128x128xbf16>, vector<32x128xf32> -> vector<32x128xf32>
    %14 = arith.addf %7, %13 : vector<32x128xf32>
    %c0_12 = arith.constant 0 : index
    %c2 = arith.constant 2 : index
    %c0_13 = arith.constant 0 : index
    %15 = vector.load %arg1[%c0_12, %c2, %c0_13] : memref<2x18x128xf32, #tpu.memory_space<vmem>>, vector<2x16x128xf32>
    %16 = vector.shape_cast %15 : vector<2x16x128xf32> to vector<32x128xf32>
    %17 = arith.truncf %16 : vector<32x128xf32> to vector<32x128xbf16>
    %c2_14 = arith.constant 2 : index
    %c0_15 = arith.constant 0 : index
    %c0_16 = arith.constant 0 : index
    %18 = vector.load %arg2[%c2_14, %c0_15, %c0_16] : memref<3x128x128xbf16, #tpu.memory_space<vmem>>, vector<1x128x128xbf16>
    %19 = vector.shape_cast %18 : vector<1x128x128xbf16> to vector<128x128xbf16>
    %cst_17 = arith.constant dense<0.000000e+00> : vector<32x128xf32>
    %20 = tpu.matmul %17, %19, %cst_17 {dimension_numbers = #tpu.dot_dimension_numbers<[1], [0], [0], [1], [0, 0, 1, 1], [], []>} : vector<32x128xbf16>, vector<128x128xbf16>, vector<32x128xf32> -> vector<32x128xf32>
    %21 = arith.addf %14, %20 : vector<32x128xf32>
    %c0_18 = arith.constant 0 : index
    %c0_19 = arith.constant 0 : index
    %22 = vector.load %arg3[%c0_18, %c0_19] : memref<1x128xf32, #tpu.memory_space<vmem>>, vector<1x128xf32>
    %23 = vector.broadcast %22 : vector<1x128xf32> to vector<32x128xf32>
    %24 = arith.addf %21, %23 : vector<32x128xf32>
    %cst_20 = arith.constant 0.000000e+00 : f32
    %25 = vector.broadcast %cst_20 : f32 to vector<32x128xf32>
    %26 = arith.maximumf %24, %25 : vector<32x128xf32>
    %cst_21 = arith.constant 0.000000e+00 : f32
    %27 = vector.broadcast %cst_21 : f32 to vector<2x1x128xf32>
    %c0_22 = arith.constant 0 : index
    %c7 = arith.constant 7 : index
    %c0_23 = arith.constant 0 : index
    %28 = vector.load %arg7[%c0_22, %c7, %c0_23] : memref<2x25x128xf32, #tpu.memory_space<vmem>>, vector<2x1x128xf32>
    tpu.vector_store %arg7[%c0_22, %c7, %c0_23], %27 {strides = array<i32>} : memref<2x25x128xf32, #tpu.memory_space<vmem>>, vector<2x1x128xf32>,
    %c0_24 = arith.constant 0 : index
    %c24 = arith.constant 24 : index
    %c0_25 = arith.constant 0 : index
    %29 = vector.load %arg7[%c0_24, %c24, %c0_25] : memref<2x25x128xf32, #tpu.memory_space<vmem>>, vector<2x1x128xf32>
    tpu.vector_store %arg7[%c0_24, %c24, %c0_25], %27 {strides = array<i32>} : memref<2x25x128xf32, #tpu.memory_space<vmem>>, vector<2x1x128xf32>,
    %30 = vector.shape_cast %26 : vector<32x128xf32> to vector<2x16x128xf32>
    %c0_26 = arith.constant 0 : index
    %c8 = arith.constant 8 : index
    %c0_27 = arith.constant 0 : index
    %31 = vector.load %arg7[%c0_26, %c8, %c0_27] : memref<2x25x128xf32, #tpu.memory_space<vmem>>, vector<2x16x128xf32>
    tpu.vector_store %arg7[%c0_26, %c8, %c0_27], %30 {strides = array<i32>} : memref<2x25x128xf32, #tpu.memory_space<vmem>>, vector<2x16x128xf32>,
    %cst_28 = arith.constant 0.000000e+00 : f32
    %32 = vector.broadcast %cst_28 : f32 to vector<32x128xf32>
    %c0_29 = arith.constant 0 : index
    %c7_30 = arith.constant 7 : index
    %c0_31 = arith.constant 0 : index
    %33 = vector.load %arg7[%c0_29, %c7_30, %c0_31] : memref<2x25x128xf32, #tpu.memory_space<vmem>>, vector<2x16x128xf32>
    %34 = vector.shape_cast %33 : vector<2x16x128xf32> to vector<32x128xf32>
    %35 = arith.truncf %34 : vector<32x128xf32> to vector<32x128xbf16>
    %c0_32 = arith.constant 0 : index
    %c0_33 = arith.constant 0 : index
    %c0_34 = arith.constant 0 : index
    %36 = vector.load %arg4[%c0_32, %c0_33, %c0_34] : memref<3x128x128xbf16, #tpu.memory_space<vmem>>, vector<1x128x128xbf16>
    %37 = vector.shape_cast %36 : vector<1x128x128xbf16> to vector<128x128xbf16>
    %cst_35 = arith.constant dense<0.000000e+00> : vector<32x128xf32>
    %38 = tpu.matmul %35, %37, %cst_35 {dimension_numbers = #tpu.dot_dimension_numbers<[1], [0], [0], [1], [0, 0, 1, 1], [], []>} : vector<32x128xbf16>, vector<128x128xbf16>, vector<32x128xf32> -> vector<32x128xf32>
    %39 = arith.addf %32, %38 : vector<32x128xf32>
    %c0_36 = arith.constant 0 : index
    %c8_37 = arith.constant 8 : index
    %c0_38 = arith.constant 0 : index
    %40 = vector.load %arg7[%c0_36, %c8_37, %c0_38] : memref<2x25x128xf32, #tpu.memory_space<vmem>>, vector<2x16x128xf32>
    %41 = vector.shape_cast %40 : vector<2x16x128xf32> to vector<32x128xf32>
    %42 = arith.truncf %41 : vector<32x128xf32> to vector<32x128xbf16>
    %c1_39 = arith.constant 1 : index
    %c0_40 = arith.constant 0 : index
    %c0_41 = arith.constant 0 : index
    %43 = vector.load %arg4[%c1_39, %c0_40, %c0_41] : memref<3x128x128xbf16, #tpu.memory_space<vmem>>, vector<1x128x128xbf16>
    %44 = vector.shape_cast %43 : vector<1x128x128xbf16> to vector<128x128xbf16>
    %cst_42 = arith.constant dense<0.000000e+00> : vector<32x128xf32>
    %45 = tpu.matmul %42, %44, %cst_42 {dimension_numbers = #tpu.dot_dimension_numbers<[1], [0], [0], [1], [0, 0, 1, 1], [], []>} : vector<32x128xbf16>, vector<128x128xbf16>, vector<32x128xf32> -> vector<32x128xf32>
    %46 = arith.addf %39, %45 : vector<32x128xf32>
    %c0_43 = arith.constant 0 : index
    %c9 = arith.constant 9 : index
    %c0_44 = arith.constant 0 : index
    %47 = vector.load %arg7[%c0_43, %c9, %c0_44] : memref<2x25x128xf32, #tpu.memory_space<vmem>>, vector<2x16x128xf32>
    %48 = vector.shape_cast %47 : vector<2x16x128xf32> to vector<32x128xf32>
    %49 = arith.truncf %48 : vector<32x128xf32> to vector<32x128xbf16>
    %c2_45 = arith.constant 2 : index
    %c0_46 = arith.constant 0 : index
    %c0_47 = arith.constant 0 : index
    %50 = vector.load %arg4[%c2_45, %c0_46, %c0_47] : memref<3x128x128xbf16, #tpu.memory_space<vmem>>, vector<1x128x128xbf16>
    %51 = vector.shape_cast %50 : vector<1x128x128xbf16> to vector<128x128xbf16>
    %cst_48 = arith.constant dense<0.000000e+00> : vector<32x128xf32>
    %52 = tpu.matmul %49, %51, %cst_48 {dimension_numbers = #tpu.dot_dimension_numbers<[1], [0], [0], [1], [0, 0, 1, 1], [], []>} : vector<32x128xbf16>, vector<128x128xbf16>, vector<32x128xf32> -> vector<32x128xf32>
    %53 = arith.addf %46, %52 : vector<32x128xf32>
    %c0_49 = arith.constant 0 : index
    %c0_50 = arith.constant 0 : index
    %54 = vector.load %arg5[%c0_49, %c0_50] : memref<1x128xf32, #tpu.memory_space<vmem>>, vector<1x128xf32>
    %55 = vector.broadcast %54 : vector<1x128xf32> to vector<32x128xf32>
    %56 = arith.addf %53, %55 : vector<32x128xf32>
    %cst_51 = arith.constant 0.000000e+00 : f32
    %57 = vector.broadcast %cst_51 : f32 to vector<32x128xf32>
    %58 = arith.maximumf %56, %57 : vector<32x128xf32>
    %59 = vector.shape_cast %58 : vector<32x128xf32> to vector<2x16x128xf32>
    %c0_52 = arith.constant 0 : index
    %c0_53 = arith.constant 0 : index
    %c0_54 = arith.constant 0 : index
    %60 = vector.load %arg6[%c0_52, %c0_53, %c0_54] : memref<2x16x128xf32, #tpu.memory_space<vmem>>, vector<2x16x128xf32>
    tpu.vector_store %arg6[%c0_52, %c0_53, %c0_54], %59 {strides = array<i32>} : memref<2x16x128xf32, #tpu.memory_space<vmem>>, vector<2x16x128xf32>,
    return
  }
  func.func @transform_0(%arg0: i32) -> (i32, i32, i32) {
    %c0_i32 = arith.constant 0 : i32
    %c0_i32_0 = arith.constant 0 : i32
    %c0_i32_1 = arith.constant 0 : i32
    return %arg0, %c0_i32, %c0_i32_0 : i32, i32, i32
  }
  func.func @transform_1(%arg0: i32) -> (i32, i32, i32) {
    %c0_i32 = arith.constant 0 : i32
    %c0_i32_0 = arith.constant 0 : i32
    %c0_i32_1 = arith.constant 0 : i32
    %c0_i32_2 = arith.constant 0 : i32
    return %c0_i32, %c0_i32_0, %c0_i32_1 : i32, i32, i32
  }
  func.func @transform_2(%arg0: i32) -> (i32, i32) {
    %c0_i32 = arith.constant 0 : i32
    %c0_i32_0 = arith.constant 0 : i32
    %c0_i32_1 = arith.constant 0 : i32
    return %c0_i32, %c0_i32_0 : i32, i32
  }
  func.func @transform_3(%arg0: i32) -> (i32, i32, i32) {
    %c0_i32 = arith.constant 0 : i32
    %c0_i32_0 = arith.constant 0 : i32
    %c0_i32_1 = arith.constant 0 : i32
    %c0_i32_2 = arith.constant 0 : i32
    return %c0_i32, %c0_i32_0, %c0_i32_1 : i32, i32, i32
  }
  func.func @transform_4(%arg0: i32) -> (i32, i32) {
    %c0_i32 = arith.constant 0 : i32
    %c0_i32_0 = arith.constant 0 : i32
    %c0_i32_1 = arith.constant 0 : i32
    return %c0_i32, %c0_i32_0 : i32, i32
  }
  func.func @transform_5(%arg0: i32) -> (i32, i32, i32) {
    %c0_i32 = arith.constant 0 : i32
    %c0_i32_0 = arith.constant 0 : i32
    %c0_i32_1 = arith.constant 0 : i32
    return %arg0, %c0_i32, %c0_i32_0 : i32, i32, i32
  }
}

</mosaic_0001>

<llo_original>
// kernel: temporal_block_forward.1
$region0: #{temporal_block_forward.1}
  #allocation0 [shape = 'u32[]', space=smem, size = 0x4, offset = 0x4, fixed_abs, tag = 'smem constant byte address 0x4 - core index']
  #allocation1 [shape = 'u32[144,128]{1,0:T(1,128)}', space=vmem, size = 0x12000, scoped, tag = 'internal scratch']
  #allocation2 [shape = 'f32[2,25,128]{2,1,0:T(8,128)}', space=vmem, size = 0x8000, scoped, tag = 'scratch operand']
  %s0 = inlined_call_operand.vmem [shape: f32[2,18,128], index: 0, kind: input, shape index: {}]
  %s1 = inlined_call_operand.hbm [shape: bf16[3,128,128], index: 1, kind: input, shape index: {}]
  %s2 = inlined_call_operand.vmem [shape: f32[1,128], index: 2, kind: input, shape index: {}]
  %s3 = inlined_call_operand.hbm [shape: bf16[3,128,128], index: 3, kind: input, shape index: {}]
  %s4 = inlined_call_operand.vmem [shape: f32[1,128], index: 4, kind: input, shape index: {}]
  %s5 = inlined_call_operand.vmem [shape: f32[2,16,128], index: 5, kind: output, shape index: {}]
  %s6 = sld [smem:[#allocation0]]
  $region38: #{temporal_block_forward.1} parent=0
    _
  %s8 = ssub.s32 1, %s6
  %s9 = scalar_select 0, %s8, %s6
  $region1: #{temporal_block_forward.1} parent=0
    #allocation3 [shape = 'u8[98304]{0}', space=vmem, size = 0x18000, scoped, tag = 'input window, operand 1, single buffered']
    #allocation4 [shape = 's32[1]{0}', space=sflag, size = 0x4, scoped, tag = 'scoped memory for temporal_block_forward.1']
    #allocation5 [shape = 'u8[98304]{0}', space=vmem, size = 0x18000, scoped, tag = 'input window, operand 3, single buffered']
    #allocation6 [shape = 's32[1]{0}', space=sflag, size = 0x4, scoped, tag = 'scoped memory for temporal_block_forward.1']
    %10 = vsyncpa [#allocation4], 0
    %11 = vsyncpa [#allocation6], 0
    // Predicated region
    $region2: #{temporal_block_forward.1} parent=1 // pred_check
      _
    $region3: #{temporal_block_forward.1} parent=1 // pred_check_branch
      %13 = sbr.rel (0) target = $region5
    $region4: #{temporal_block_forward.1} parent=1 // pred_region
      _
    $region5: #{temporal_block_forward.1} parent=1 // pred_fallthru
      _
    // Predicated region
    $region6: #{temporal_block_forward.1} parent=1 // pred_check
      _
    $region7: #{temporal_block_forward.1} parent=1 // pred_check_branch
      %15 = sbr.rel (0) target = $region9
    $region8: #{temporal_block_forward.1} parent=1 // pred_region
      %s17 = ssub.s32 3072, 3072
      %18 = vsyncadd [#allocation4], %s17
      %s19 = sshll.u32 [#allocation3], 4
      %s20 = int_to_ptr.vmem [resolvable:$true] %s19
      %25 = dma.hbm_to_vmem [thread:$0]  %s1, 3072, %s20, [#allocation4], 64, 64, 4
    $region9: #{temporal_block_forward.1} parent=1 // pred_fallthru
      _
    // Predicated region
    $region10: #{temporal_block_forward.1} parent=1 // pred_check
      _
    $region11: #{temporal_block_forward.1} parent=1 // pred_check_branch
      %27 = sbr.rel (0) target = $region13
    $region12: #{temporal_block_forward.1} parent=1 // pred_region
      _
    $region13: #{temporal_block_forward.1} parent=1 // pred_fallthru
      _
    // Predicated region
    $region14: #{temporal_block_forward.1} parent=1 // pred_check
      _
    $region15: #{temporal_block_forward.1} parent=1 // pred_check_branch
      %29 = sbr.rel (0) target = $region17
    $region16: #{temporal_block_forward.1} parent=1 // pred_region
      %s31 = ssub.s32 3072, 3072
      %32 = vsyncadd [#allocation6], %s31
      %s33 = sshll.u32 [#allocation5], 4
      %s34 = int_to_ptr.vmem [resolvable:$true] %s33
      %39 = dma.hbm_to_vmem [thread:$0]  %s3, 3072, %s34, [#allocation6], 64, 64, 4
    $region17: #{temporal_block_forward.1} parent=1 // pred_fallthru
      _
    // Predicated region
    $region18: #{temporal_block_forward.1} parent=1 // pred_check
      _
    $region19: #{temporal_block_forward.1} parent=1 // pred_check_branch
      %41 = sbr.rel (0) target = $region21
    $region20: #{temporal_block_forward.1} parent=1 // pred_region
      _
    $region21: #{temporal_block_forward.1} parent=1 // pred_fallthru
      _
    // Predicated region
    $region22: #{temporal_block_forward.1} parent=1 // pred_check
      _
    $region23: #{temporal_block_forward.1} parent=1 // pred_check_branch
      %43 = sbr.rel (0) target = $region25
    $region24: #{temporal_block_forward.1} parent=1 // pred_region
      %44 = dma.done [#allocation4], 3072
    $region25: #{temporal_block_forward.1} parent=1 // pred_fallthru
      _
    // Predicated region
    $region26: #{temporal_block_forward.1} parent=1 // pred_check
      _
    $region27: #{temporal_block_forward.1} parent=1 // pred_check_branch
      %46 = sbr.rel (0) target = $region29
    $region28: #{temporal_block_forward.1} parent=1 // pred_region
      %47 = dma.done [#allocation6], 3072
    $region29: #{temporal_block_forward.1} parent=1 // pred_fallthru
      _
    %v49 = vld [vmem:[%s0] sm:$0xff]
    %v50 = vld [vmem:[%s0 + $0x8] sm:$0xff]
    %v51 = vld [vmem:[%s0 + $0x18] sm:$0xff]
    %v52 = vld [vmem:[%s0 + $0x20] sm:$0xff]
    %v53 = vpack.c.bf16 %v50, %v49
    %v54 = vpack.c.bf16 %v52, %v51
    %v55 = vld [vmem:[#allocation3] sm:$0xf]
    %v56 = vld [vmem:[#allocation3 + $0x4] sm:$0xf]
    %v57 = vld [vmem:[#allocation3 + $0x8] sm:$0xf]
    %v58 = vld [vmem:[#allocation3 + $0xc] sm:$0xf]
    %v59 = vld [vmem:[#allocation3 + $0x10] sm:$0xf]
    %v60 = vld [vmem:[#allocation3 + $0x14] sm:$0xf]
    %v61 = vld [vmem:[#allocation3 + $0x18] sm:$0xf]
    %v62 = vld [vmem:[#allocation3 + $0x1c] sm:$0xf]
    %v63 = vld [vmem:[#allocation3 + $0x20] sm:$0xf]
    %v64 = vld [vmem:[#allocation3 + $0x24] sm:$0xf]
    %v65 = vld [vmem:[#allocation3 + $0x28] sm:$0xf]
    %v66 = vld [vmem:[#allocation3 + $0x2c] sm:$0xf]
    %v67 = vld [vmem:[#allocation3 + $0x30] sm:$0xf]
    %v68 = vld [vmem:[#allocation3 + $0x34] sm:$0xf]
    %v69 = vld [vmem:[#allocation3 + $0x38] sm:$0xf]
    %v70 = vld [vmem:[#allocation3 + $0x3c] sm:$0xf]
    %v71 = vld [vmem:[%s0 + $0x1] sm:$0xff]
    %v72 = vld [vmem:[%s0 + $0x9] sm:$0xff]
    %v73 = vld [vmem:[%s0 + $0x19] sm:$0xff]
    %v74 = vld [vmem:[%s0 + $0x21] sm:$0xff]
    %v75 = vpack.c.bf16 %v72, %v71
    %v76 = vpack.c.bf16 %v74, %v73
    %s77 = scalar_lea.vmem [#allocation3], 64
    %v78 = vld [vmem:[%s77] sm:$0xf]
    %v79 = vld [vmem:[%s77 + $0x4] sm:$0xf]
    %v80 = vld [vmem:[%s77 + $0x8] sm:$0xf]
    %v81 = vld [vmem:[%s77 + $0xc] sm:$0xf]
    %v82 = vld [vmem:[%s77 + $0x10] sm:$0xf]
    %v83 = vld [vmem:[%s77 + $0x14] sm:$0xf]
    %v84 = vld [vmem:[%s77 + $0x18] sm:$0xf]
    %v85 = vld [vmem:[%s77 + $0x1c] sm:$0xf]
    %v86 = vld [vmem:[%s77 + $0x20] sm:$0xf]
    %v87 = vld [vmem:[%s77 + $0x24] sm:$0xf]
    %v88 = vld [vmem:[%s77 + $0x28] sm:$0xf]
    %v89 = vld [vmem:[%s77 + $0x2c] sm:$0xf]
    %v90 = vld [vmem:[%s77 + $0x30] sm:$0xf]
    %v91 = vld [vmem:[%s77 + $0x34] sm:$0xf]
    %v92 = vld [vmem:[%s77 + $0x38] sm:$0xf]
    %v93 = vld [vmem:[%s77 + $0x3c] sm:$0xf]
    %v110 = vunpack.c.l.b16 %v78
    %v111 = vunpack.c.l.b16 %v79
    %v112 = vunpack.c.l.b16 %v80
    %v113 = vunpack.c.l.b16 %v81
    %v114 = vunpack.c.l.b16 %v82
    %v115 = vunpack.c.l.b16 %v83
    %v116 = vunpack.c.l.b16 %v84
    %v117 = vunpack.c.l.b16 %v85
    %v118 = vunpack.c.l.b16 %v86
    %v119 = vunpack.c.l.b16 %v87
    %v120 = vunpack.c.l.b16 %v88
    %v121 = vunpack.c.l.b16 %v89
    %v122 = vunpack.c.l.b16 %v90
    %v123 = vunpack.c.l.b16 %v91
    %v124 = vunpack.c.l.b16 %v92
    %v125 = vunpack.c.l.b16 %v93
    %v126 = vpack.c.b16 %v111, %v110
    %v127 = vpack.c.b16 %v113, %v112
    %v128 = vpack.c.b16 %v115, %v114
    %v129 = vpack.c.b16 %v117, %v116
    %v130 = vpack.c.b16 %v119, %v118
    %v131 = vpack.c.b16 %v121, %v120
    %v132 = vpack.c.b16 %v123, %v122
    %v133 = vpack.c.b16 %v125, %v124
    %142 = vmatprep.subr.bf16.mxu0 0
    %143 = vmatpush1.bf16.msra.mxu0 %v133
    %144 = vmatprep.subr.bf16.mxu0 0
    %145 = vmatpush1.bf16.msra.mxu0 %v132
    %146 = vmatprep.subr.bf16.mxu0 0
    %147 = vmatpush1.bf16.msra.mxu0 %v131
    %148 = vmatprep.subr.bf16.mxu0 0
    %149 = vmatpush1.bf16.msra.mxu0 %v130
    %150 = vmatprep.subr.bf16.mxu0 0
    %151 = vmatpush1.bf16.msra.mxu0 %v129
    %152 = vmatprep.subr.bf16.mxu0 0
    %153 = vmatpush1.bf16.msra.mxu0 %v128
    %154 = vmatprep.subr.bf16.mxu0 0
    %155 = vmatpush1.bf16.msra.mxu0 %v127
    %156 = vmatprep.subr.bf16.mxu0 0
    %157 = vmatpush1.bf16.msra.mxu0 %v126
    %158 = vmatprep.subr.bf16.mxu0 0
    %159 = vmatpush2.bf16.msra.mxu0 0
    %160 = vmatprep.subr.bf16.mxu0 0
    %161 = vmatpush2.bf16.msra.mxu0 0
    %162 = vmatprep.subr.bf16.mxu0 0
    %163 = vmatpush2.bf16.msra.mxu0 0
    %164 = vmatprep.subr.bf16.mxu0 0
    %165 = vmatpush2.bf16.msra.mxu0 0
    %166 = vmatprep.subr.bf16.mxu0 0
    %167 = vmatpush2.bf16.msra.mxu0 0
    %168 = vmatprep.subr.bf16.mxu0 0
    %169 = vmatpush2.bf16.msra.mxu0 0
    %170 = vmatprep.subr.bf16.mxu0 0
    %171 = vmatpush2.bf16.msra.mxu0 0
    %172 = vmatprep.subr.bf16.mxu0 0
    %173 = vmatpush2.bf16.msra.mxu0 0
    %174 = vmatprep.mubr.bf16.mxu0 0
    %175 = vmatmul.mubr.bf16.gmra.mxu0 %v75
    %v176 = vpop.f32.mrf.mxu0
    %v177 = vadd.f32 0.0, %v176
    %v178 = vpop.f32.mrf.mxu0
    %v179 = vpop.f32.mrf.mxu0
    %v180 = vadd.f32 0.0, %v179
    %v181 = vpop.f32.mrf.mxu0
    %182 = vmatprep.mubr.bf16.mxu0 0
    %183 = vmatmul.mubr.bf16.gmra.mxu0 %v76
    %v184 = vpop.f32.mrf.mxu0
    %v185 = vadd.f32 0.0, %v184
    %v186 = vpop.f32.mrf.mxu0
    %v187 = vpop.f32.mrf.mxu0
    %v188 = vadd.f32 0.0, %v187
    %v189 = vpop.f32.mrf.mxu0
    %190 = vdwg.mxu0
    %v207 = vunpack.c.l.b16 %v55
    %v208 = vunpack.c.l.b16 %v56
    %v209 = vunpack.c.l.b16 %v57
    %v210 = vunpack.c.l.b16 %v58
    %v211 = vunpack.c.l.b16 %v59
    %v212 = vunpack.c.l.b16 %v60
    %v213 = vunpack.c.l.b16 %v61
    %v214 = vunpack.c.l.b16 %v62
    %v215 = vunpack.c.l.b16 %v63
    %v216 = vunpack.c.l.b16 %v64
    %v217 = vunpack.c.l.b16 %v65
    %v218 = vunpack.c.l.b16 %v66
    %v219 = vunpack.c.l.b16 %v67
    %v220 = vunpack.c.l.b16 %v68
    %v221 = vunpack.c.l.b16 %v69
    %v222 = vunpack.c.l.b16 %v70
    %v223 = vpack.c.b16 %v208, %v207
    %v224 = vpack.c.b16 %v210, %v209
    %v225 = vpack.c.b16 %v212, %v211
    %v226 = vpack.c.b16 %v214, %v213
    %v227 = vpack.c.b16 %v216, %v215
    %v228 = vpack.c.b16 %v218, %v217
    %v229 = vpack.c.b16 %v220, %v219
    %v230 = vpack.c.b16 %v222, %v221
    %239 = vmatprep.subr.bf16.mxu0 0
    %240 = vmatpush1.bf16.msra.mxu0 %v230
    %241 = vmatprep.subr.bf16.mxu0 0
    %242 = vmatpush1.bf16.msra.mxu0 %v229
    %243 = vmatprep.subr.bf16.mxu0 0
    %244 = vmatpush1.bf16.msra.mxu0 %v228
    %245 = vmatprep.subr.bf16.mxu0 0
    %246 = vmatpush1.bf16.msra.mxu0 %v227
    %247 = vmatprep.subr.bf16.mxu0 0
    %248 = vmatpush1.bf16.msra.mxu0 %v226
    %249 = vmatprep.subr.bf16.mxu0 0
    %250 = vmatpush1.bf16.msra.mxu0 %v225
    %251 = vmatprep.subr.bf16.mxu0 0
    %252 = vmatpush1.bf16.msra.mxu0 %v224
    %253 = vmatprep.subr.bf16.mxu0 0
    %254 = vmatpush1.bf16.msra.mxu0 %v223
    %255 = vmatprep.subr.bf16.mxu0 0
    %256 = vmatpush2.bf16.msra.mxu0 0
    %257 = vmatprep.subr.bf16.mxu0 0
    %258 = vmatpush2.bf16.msra.mxu0 0
    %259 = vmatprep.subr.bf16.mxu0 0
    %260 = vmatpush2.bf16.msra.mxu0 0
    %261 = vmatprep.subr.bf16.mxu0 0
    %262 = vmatpush2.bf16.msra.mxu0 0
    %263 = vmatprep.subr.bf16.mxu0 0
    %264 = vmatpush2.bf16.msra.mxu0 0
    %265 = vmatprep.subr.bf16.mxu0 0
    %266 = vmatpush2.bf16.msra.mxu0 0
    %267 = vmatprep.subr.bf16.mxu0 0
    %268 = vmatpush2.bf16.msra.mxu0 0
    %269 = vmatprep.subr.bf16.mxu0 0
    %270 = vmatpush2.bf16.msra.mxu0 0
    %271 = vmatprep.mubr.bf16.mxu0 0
    %272 = vmatmul.mubr.bf16.gmra.mxu0 %v53
    %v273 = vpop.f32.mrf.mxu0
    %v274 = vadd.f32 %v177, %v273
    %v275 = vpop.f32.mrf.mxu0
    %v276 = vpop.f32.mrf.mxu0
    %v277 = vadd.f32 %v180, %v276
    %v278 = vpop.f32.mrf.mxu0
    %279 = vmatprep.mubr.bf16.mxu0 0
    %280 = vmatmul.mubr.bf16.gmra.mxu0 %v54
    %v281 = vpop.f32.mrf.mxu0
    %v282 = vadd.f32 %v185, %v281
    %v283 = vpop.f32.mrf.mxu0
    %v284 = vpop.f32.mrf.mxu0
    %v285 = vadd.f32 %v188, %v284
    %v286 = vpop.f32.mrf.mxu0
    %287 = vdwg.mxu0
    %v288 = vld [vmem:[%s0 + $0x2] sm:$0xff]
    %v289 = vld [vmem:[%s0 + $0xa] sm:$0xff]
    %v290 = vld [vmem:[%s0 + $0x1a] sm:$0xff]
    %v291 = vld [vmem:[%s0 + $0x22] sm:$0xff]
    %v292 = vpack.c.bf16 %v289, %v288
    %v293 = vpack.c.bf16 %v291, %v290
    %s294 = scalar_lea.vmem [#allocation3], 128
    %v295 = vld [vmem:[%s294] sm:$0xf]
    %v296 = vld [vmem:[%s294 + $0x4] sm:$0xf]
    %v297 = vld [vmem:[%s294 + $0x8] sm:$0xf]
    %v298 = vld [vmem:[%s294 + $0xc] sm:$0xf]
    %v299 = vld [vmem:[%s294 + $0x10] sm:$0xf]
    %v300 = vld [vmem:[%s294 + $0x14] sm:$0xf]
    %v301 = vld [vmem:[%s294 + $0x18] sm:$0xf]
    %v302 = vld [vmem:[%s294 + $0x1c] sm:$0xf]
    %v303 = vld [vmem:[%s294 + $0x20] sm:$0xf]
    %v304 = vld [vmem:[%s294 + $0x24] sm:$0xf]
    %v305 = vld [vmem:[%s294 + $0x28] sm:$0xf]
    %v306 = vld [vmem:[%s294 + $0x2c] sm:$0xf]
    %v307 = vld [vmem:[%s294 + $0x30] sm:$0xf]
    %v308 = vld [vmem:[%s294 + $0x34] sm:$0xf]
    %v309 = vld [vmem:[%s294 + $0x38] sm:$0xf]
    %v310 = vld [vmem:[%s294 + $0x3c] sm:$0xf]
    %v327 = vunpack.c.l.b16 %v295
    %v328 = vunpack.c.l.b16 %v296
    %v329 = vunpack.c.l.b16 %v297
    %v330 = vunpack.c.l.b16 %v298
    %v331 = vunpack.c.l.b16 %v299
    %v332 = vunpack.c.l.b16 %v300
    %v333 = vunpack.c.l.b16 %v301
    %v334 = vunpack.c.l.b16 %v302
    %v335 = vunpack.c.l.b16 %v303
    %v336 = vunpack.c.l.b16 %v304
    %v337 = vunpack.c.l.b16 %v305
    %v338 = vunpack.c.l.b16 %v306
    %v339 = vunpack.c.l.b16 %v307
    %v340 = vunpack.c.l.b16 %v308
    %v341 = vunpack.c.l.b16 %v309
    %v342 = vunpack.c.l.b16 %v310
    %v343 = vpack.c.b16 %v328, %v327
    %v344 = vpack.c.b16 %v330, %v329
    %v345 = vpack.c.b16 %v332, %v331
    %v346 = vpack.c.b16 %v334, %v333
    %v347 = vpack.c.b16 %v336, %v335
    %v348 = vpack.c.b16 %v338, %v337
    %v349 = vpack.c.b16 %v340, %v339
    %v350 = vpack.c.b16 %v342, %v341
    %359 = vmatprep.subr.bf16.mxu0 0
    %360 = vmatpush1.bf16.msra.mxu0 %v350
    %361 = vmatprep.subr.bf16.mxu0 0
    %362 = vmatpush1.bf16.msra.mxu0 %v349
    %363 = vmatprep.subr.bf16.mxu0 0
    %364 = vmatpush1.bf16.msra.mxu0 %v348
    %365 = vmatprep.subr.bf16.mxu0 0
    %366 = vmatpush1.bf16.msra.mxu0 %v347
    %367 = vmatprep.subr.bf16.mxu0 0
    %368 = vmatpush1.bf16.msra.mxu0 %v346
    %369 = vmatprep.subr.bf16.mxu0 0
    %370 = vmatpush1.bf16.msra.mxu0 %v345
    %371 = vmatprep.subr.bf16.mxu0 0
    %372 = vmatpush1.bf16.msra.mxu0 %v344
    %373 = vmatprep.subr.bf16.mxu0 0
    %374 = vmatpush1.bf16.msra.mxu0 %v343
    %375 = vmatprep.subr.bf16.mxu0 0
    %376 = vmatpush2.bf16.msra.mxu0 0
    %377 = vmatprep.subr.bf16.mxu0 0
    %378 = vmatpush2.bf16.msra.mxu0 0
    %379 = vmatprep.subr.bf16.mxu0 0
    %380 = vmatpush2.bf16.msra.mxu0 0
    %381 = vmatprep.subr.bf16.mxu0 0
    %382 = vmatpush2.bf16.msra.mxu0 0
    %383 = vmatprep.subr.bf16.mxu0 0
    %384 = vmatpush2.bf16.msra.mxu0 0
    %385 = vmatprep.subr.bf16.mxu0 0
    %386 = vmatpush2.bf16.msra.mxu0 0
    %387 = vmatprep.subr.bf16.mxu0 0
    %388 = vmatpush2.bf16.msra.mxu0 0
    %389 = vmatprep.subr.bf16.mxu0 0
    %390 = vmatpush2.bf16.msra.mxu0 0
    %391 = vmatprep.mubr.bf16.mxu0 0
    %392 = vmatmul.mubr.bf16.gmra.mxu0 %v292
    %v393 = vpop.f32.mrf.mxu0
    %v394 = vadd.f32 0.0, %v393
    %v395 = vpop.f32.mrf.mxu0
    %v396 = vpop.f32.mrf.mxu0
    %v397 = vadd.f32 0.0, %v396
    %v398 = vpop.f32.mrf.mxu0
    %399 = vmatprep.mubr.bf16.mxu0 0
    %400 = vmatmul.mubr.bf16.gmra.mxu0 %v293
    %v401 = vpop.f32.mrf.mxu0
    %v402 = vadd.f32 0.0, %v401
    %v403 = vpop.f32.mrf.mxu0
    %v404 = vpop.f32.mrf.mxu0
    %v405 = vadd.f32 0.0, %v404
    %v406 = vpop.f32.mrf.mxu0
    %407 = vdwg.mxu0
    %v408 = vadd.f32 %v274, %v394
    %v409 = vadd.f32 %v277, %v397
    %v410 = vadd.f32 %v282, %v402
    %v411 = vadd.f32 %v285, %v405
    %v412 = vld [vmem:[%s2] sm:$0x1]
    %v414 = vlaneseq
    %v415 = vshrl.u32 %v414, 7
    %v416 = vsub.s32 0, %v415
    %v417 = vrot.slane %v412, %v416
    %v419 = vadd.f32 %v408, %v417
    %v420 = vadd.f32 %v409, %v417
    %v421 = vadd.f32 %v410, %v417
    %v422 = vadd.f32 %v411, %v417
    %v423 = vmax.f32 %v419, 0.0
    %v424 = vmax.f32 %v420, 0.0
    %v425 = vmax.f32 %v421, 0.0
    %v426 = vmax.f32 %v422, 0.0
    %427 = vst [vmem:[#allocation2 + $0x7] sm:$0x1] 0.0
    %428 = vst [vmem:[#allocation2 + $0x27] sm:$0x1] 0.0
    %429 = vst [vmem:[#allocation2 + $0x18] sm:$0x1] 0.0
    %430 = vst [vmem:[#allocation2 + $0x38] sm:$0x1] 0.0
    %431 = vst [vmem:[#allocation2 + $0x8] sm:$0xff] %v423
    %432 = vst [vmem:[#allocation2 + $0x10] sm:$0xff] %v424
    %433 = vst [vmem:[#allocation2 + $0x28] sm:$0xff] %v425
    %434 = vst [vmem:[#allocation2 + $0x30] sm:$0xff] %v426
    %v435 = vld [vmem:[#allocation2 + $0x7] sm:$0xff]
    %v436 = vld [vmem:[#allocation2 + $0xf] sm:$0xff]
    %v437 = vld [vmem:[#allocation2 + $0x27] sm:$0xff]
    %v438 = vld [vmem:[#allocation2 + $0x2f] sm:$0xff]
    %v439 = vpack.c.bf16 %v436, %v435
    %v440 = vpack.c.bf16 %v438, %v437
    %v441 = vld [vmem:[#allocation5] sm:$0xf]
    %v442 = vld [vmem:[#allocation5 + $0x4] sm:$0xf]
    %v443 = vld [vmem:[#allocation5 + $0x8] sm:$0xf]
    %v444 = vld [vmem:[#allocation5 + $0xc] sm:$0xf]
    %v445 = vld [vmem:[#allocation5 + $0x10] sm:$0xf]
    %v446 = vld [vmem:[#allocation5 + $0x14] sm:$0xf]
    %v447 = vld [vmem:[#allocation5 + $0x18] sm:$0xf]
    %v448 = vld [vmem:[#allocation5 + $0x1c] sm:$0xf]
    %v449 = vld [vmem:[#allocation5 + $0x20] sm:$0xf]
    %v450 = vld [vmem:[#allocation5 + $0x24] sm:$0xf]
    %v451 = vld [vmem:[#allocation5 + $0x28] sm:$0xf]
    %v452 = vld [vmem:[#allocation5 + $0x2c] sm:$0xf]
    %v453 = vld [vmem:[#allocation5 + $0x30] sm:$0xf]
    %v454 = vld [vmem:[#allocation5 + $0x34] sm:$0xf]
    %v455 = vld [vmem:[#allocation5 + $0x38] sm:$0xf]
    %v456 = vld [vmem:[#allocation5 + $0x3c] sm:$0xf]
    %v457 = vld [vmem:[#allocation2 + $0x8] sm:$0xff]
    %v458 = vld [vmem:[#allocation2 + $0x10] sm:$0xff]
    %v459 = vld [vmem:[#allocation2 + $0x28] sm:$0xff]
    %v460 = vld [vmem:[#allocation2 + $0x30] sm:$0xff]
    %v461 = vpack.c.bf16 %v458, %v457
    %v462 = vpack.c.bf16 %v460, %v459
    %s463 = scalar_lea.vmem [#allocation5], 64
    %v464 = vld [vmem:[%s463] sm:$0xf]
    %v465 = vld [vmem:[%s463 + $0x4] sm:$0xf]
    %v466 = vld [vmem:[%s463 + $0x8] sm:$0xf]
    %v467 = vld [vmem:[%s463 + $0xc] sm:$0xf]
    %v468 = vld [vmem:[%s463 + $0x10] sm:$0xf]
    %v469 = vld [vmem:[%s463 + $0x14] sm:$0xf]
    %v470 = vld [vmem:[%s463 + $0x18] sm:$0xf]
    %v471 = vld [vmem:[%s463 + $0x1c] sm:$0xf]
    %v472 = vld [vmem:[%s463 + $0x20] sm:$0xf]
    %v473 = vld [vmem:[%s463 + $0x24] sm:$0xf]
    %v474 = vld [vmem:[%s463 + $0x28] sm:$0xf]
    %v475 = vld [vmem:[%s463 + $0x2c] sm:$0xf]
    %v476 = vld [vmem:[%s463 + $0x30] sm:$0xf]
    %v477 = vld [vmem:[%s463 + $0x34] sm:$0xf]
    %v478 = vld [vmem:[%s463 + $0x38] sm:$0xf]
    %v479 = vld [vmem:[%s463 + $0x3c] sm:$0xf]
    %v496 = vunpack.c.l.b16 %v464
    %v497 = vunpack.c.l.b16 %v465
    %v498 = vunpack.c.l.b16 %v466
    %v499 = vunpack.c.l.b16 %v467
    %v500 = vunpack.c.l.b16 %v468
    %v501 = vunpack.c.l.b16 %v469
    %v502 = vunpack.c.l.b16 %v470
    %v503 = vunpack.c.l.b16 %v471
    %v504 = vunpack.c.l.b16 %v472
    %v505 = vunpack.c.l.b16 %v473
    %v506 = vunpack.c.l.b16 %v474
    %v507 = vunpack.c.l.b16 %v475
    %v508 = vunpack.c.l.b16 %v476
    %v509 = vunpack.c.l.b16 %v477
    %v510 = vunpack.c.l.b16 %v478
    %v511 = vunpack.c.l.b16 %v479
    %v512 = vpack.c.b16 %v497, %v496
    %v513 = vpack.c.b16 %v499, %v498
    %v514 = vpack.c.b16 %v501, %v500
    %v515 = vpack.c.b16 %v503, %v502
    %v516 = vpack.c.b16 %v505, %v504
    %v517 = vpack.c.b16 %v507, %v506
    %v518 = vpack.c.b16 %v509, %v508
    %v519 = vpack.c.b16 %v511, %v510
    %528 = vmatprep.subr.bf16.mxu0 0
    %529 = vmatpush1.bf16.msra.mxu0 %v519
    %530 = vmatprep.subr.bf16.mxu0 0
    %531 = vmatpush1.bf16.msra.mxu0 %v518
    %532 = vmatprep.subr.bf16.mxu0 0
    %533 = vmatpush1.bf16.msra.mxu0 %v517
    %534 = vmatprep.subr.bf16.mxu0 0
    %535 = vmatpush1.bf16.msra.mxu0 %v516
    %536 = vmatprep.subr.bf16.mxu0 0
    %537 = vmatpush1.bf16.msra.mxu0 %v515
    %538 = vmatprep.subr.bf16.mxu0 0
    %539 = vmatpush1.bf16.msra.mxu0 %v514
    %540 = vmatprep.subr.bf16.mxu0 0
    %541 = vmatpush1.bf16.msra.mxu0 %v513
    %542 = vmatprep.subr.bf16.mxu0 0
    %543 = vmatpush1.bf16.msra.mxu0 %v512
    %544 = vmatprep.subr.bf16.mxu0 0
    %545 = vmatpush2.bf16.msra.mxu0 0
    %546 = vmatprep.subr.bf16.mxu0 0
    %547 = vmatpush2.bf16.msra.mxu0 0
    %548 = vmatprep.subr.bf16.mxu0 0
    %549 = vmatpush2.bf16.msra.mxu0 0
    %550 = vmatprep.subr.bf16.mxu0 0
    %551 = vmatpush2.bf16.msra.mxu0 0
    %552 = vmatprep.subr.bf16.mxu0 0
    %553 = vmatpush2.bf16.msra.mxu0 0
    %554 = vmatprep.subr.bf16.mxu0 0
    %555 = vmatpush2.bf16.msra.mxu0 0
    %556 = vmatprep.subr.bf16.mxu0 0
    %557 = vmatpush2.bf16.msra.mxu0 0
    %558 = vmatprep.subr.bf16.mxu0 0
    %559 = vmatpush2.bf16.msra.mxu0 0
    %560 = vmatprep.mubr.bf16.mxu0 0
    %561 = vmatmul.mubr.bf16.gmra.mxu0 %v461
    %v562 = vpop.f32.mrf.mxu0
    %v563 = vadd.f32 0.0, %v562
    %v564 = vpop.f32.mrf.mxu0
    %v565 = vpop.f32.mrf.mxu0
    %v566 = vadd.f32 0.0, %v565
    %v567 = vpop.f32.mrf.mxu0
    %568 = vmatprep.mubr.bf16.mxu0 0
    %569 = vmatmul.mubr.bf16.gmra.mxu0 %v462
    %v570 = vpop.f32.mrf.mxu0
    %v571 = vadd.f32 0.0, %v570
    %v572 = vpop.f32.mrf.mxu0
    %v573 = vpop.f32.mrf.mxu0
    %v574 = vadd.f32 0.0, %v573
    %v575 = vpop.f32.mrf.mxu0
    %576 = vdwg.mxu0
    %v593 = vunpack.c.l.b16 %v441
    %v594 = vunpack.c.l.b16 %v442
    %v595 = vunpack.c.l.b16 %v443
    %v596 = vunpack.c.l.b16 %v444
    %v597 = vunpack.c.l.b16 %v445
    %v598 = vunpack.c.l.b16 %v446
    %v599 = vunpack.c.l.b16 %v447
    %v600 = vunpack.c.l.b16 %v448
    %v601 = vunpack.c.l.b16 %v449
    %v602 = vunpack.c.l.b16 %v450
    %v603 = vunpack.c.l.b16 %v451
    %v604 = vunpack.c.l.b16 %v452
    %v605 = vunpack.c.l.b16 %v453
    %v606 = vunpack.c.l.b16 %v454
    %v607 = vunpack.c.l.b16 %v455
    %v608 = vunpack.c.l.b16 %v456
    %v609 = vpack.c.b16 %v594, %v593
    %v610 = vpack.c.b16 %v596, %v595
    %v611 = vpack.c.b16 %v598, %v597
    %v612 = vpack.c.b16 %v600, %v599
    %v613 = vpack.c.b16 %v602, %v601
    %v614 = vpack.c.b16 %v604, %v603
    %v615 = vpack.c.b16 %v606, %v605
    %v616 = vpack.c.b16 %v608, %v607
    %625 = vmatprep.subr.bf16.mxu0 0
    %626 = vmatpush1.bf16.msra.mxu0 %v616
    %627 = vmatprep.subr.bf16.mxu0 0
    %628 = vmatpush1.bf16.msra.mxu0 %v615
    %629 = vmatprep.subr.bf16.mxu0 0
    %630 = vmatpush1.bf16.msra.mxu0 %v614
    %631 = vmatprep.subr.bf16.mxu0 0
    %632 = vmatpush1.bf16.msra.mxu0 %v613
    %633 = vmatprep.subr.bf16.mxu0 0
    %634 = vmatpush1.bf16.msra.mxu0 %v612
    %635 = vmatprep.subr.bf16.mxu0 0
    %636 = vmatpush1.bf16.msra.mxu0 %v611
    %637 = vmatprep.subr.bf16.mxu0 0
    %638 = vmatpush1.bf16.msra.mxu0 %v610
    %639 = vmatprep.subr.bf16.mxu0 0
    %640 = vmatpush1.bf16.msra.mxu0 %v609
    %641 = vmatprep.subr.bf16.mxu0 0
    %642 = vmatpush2.bf16.msra.mxu0 0
    %643 = vmatprep.subr.bf16.mxu0 0
    %644 = vmatpush2.bf16.msra.mxu0 0
    %645 = vmatprep.subr.bf16.mxu0 0
    %646 = vmatpush2.bf16.msra.mxu0 0
    %647 = vmatprep.subr.bf16.mxu0 0
    %648 = vmatpush2.bf16.msra.mxu0 0
    %649 = vmatprep.subr.bf16.mxu0 0
    %650 = vmatpush2.bf16.msra.mxu0 0
    %651 = vmatprep.subr.bf16.mxu0 0
    %652 = vmatpush2.bf16.msra.mxu0 0
    %653 = vmatprep.subr.bf16.mxu0 0
    %654 = vmatpush2.bf16.msra.mxu0 0
    %655 = vmatprep.subr.bf16.mxu0 0
    %656 = vmatpush2.bf16.msra.mxu0 0
    %657 = vmatprep.mubr.bf16.mxu0 0
    %658 = vmatmul.mubr.bf16.gmra.mxu0 %v439
    %v659 = vpop.f32.mrf.mxu0
    %v660 = vadd.f32 %v563, %v659
    %v661 = vpop.f32.mrf.mxu0
    %v662 = vpop.f32.mrf.mxu0
    %v663 = vadd.f32 %v566, %v662
    %v664 = vpop.f32.mrf.mxu0
    %665 = vmatprep.mubr.bf16.mxu0 0
    %666 = vmatmul.mubr.bf16.gmra.mxu0 %v440
    %v667 = vpop.f32.mrf.mxu0
    %v668 = vadd.f32 %v571, %v667
    %v669 = vpop.f32.mrf.mxu0
    %v670 = vpop.f32.mrf.mxu0
    %v671 = vadd.f32 %v574, %v670
    %v672 = vpop.f32.mrf.mxu0
    %673 = vdwg.mxu0
    %v674 = vld [vmem:[#allocation2 + $0x9] sm:$0xff]
    %v675 = vld [vmem:[#allocation2 + $0x11] sm:$0xff]
    %v676 = vld [vmem:[#allocation2 + $0x29] sm:$0xff]
    %v677 = vld [vmem:[#allocation2 + $0x31] sm:$0xff]
    %v678 = vpack.c.bf16 %v675, %v674
    %v679 = vpack.c.bf16 %v677, %v676
    %s680 = scalar_lea.vmem [#allocation5], 128
    %v681 = vld [vmem:[%s680] sm:$0xf]
    %v682 = vld [vmem:[%s680 + $0x4] sm:$0xf]
    %v683 = vld [vmem:[%s680 + $0x8] sm:$0xf]
    %v684 = vld [vmem:[%s680 + $0xc] sm:$0xf]
    %v685 = vld [vmem:[%s680 + $0x10] sm:$0xf]
    %v686 = vld [vmem:[%s680 + $0x14] sm:$0xf]
    %v687 = vld [vmem:[%s680 + $0x18] sm:$0xf]
    %v688 = vld [vmem:[%s680 + $0x1c] sm:$0xf]
    %v689 = vld [vmem:[%s680 + $0x20] sm:$0xf]
    %v690 = vld [vmem:[%s680 + $0x24] sm:$0xf]
    %v691 = vld [vmem:[%s680 + $0x28] sm:$0xf]
    %v692 = vld [vmem:[%s680 + $0x2c] sm:$0xf]
    %v693 = vld [vmem:[%s680 + $0x30] sm:$0xf]
    %v694 = vld [vmem:[%s680 + $0x34] sm:$0xf]
    %v695 = vld [vmem:[%s680 + $0x38] sm:$0xf]
    %v696 = vld [vmem:[%s680 + $0x3c] sm:$0xf]
    %v713 = vunpack.c.l.b16 %v681
    %v714 = vunpack.c.l.b16 %v682
    %v715 = vunpack.c.l.b16 %v683
    %v716 = vunpack.c.l.b16 %v684
    %v717 = vunpack.c.l.b16 %v685
    %v718 = vunpack.c.l.b16 %v686
    %v719 = vunpack.c.l.b16 %v687
    %v720 = vunpack.c.l.b16 %v688
    %v721 = vunpack.c.l.b16 %v689
    %v722 = vunpack.c.l.b16 %v690
    %v723 = vunpack.c.l.b16 %v691
    %v724 = vunpack.c.l.b16 %v692
    %v725 = vunpack.c.l.b16 %v693
    %v726 = vunpack.c.l.b16 %v694
    %v727 = vunpack.c.l.b16 %v695
    %v728 = vunpack.c.l.b16 %v696
    %v729 = vpack.c.b16 %v714, %v713
    %v730 = vpack.c.b16 %v716, %v715
    %v731 = vpack.c.b16 %v718, %v717
    %v732 = vpack.c.b16 %v720, %v719
    %v733 = vpack.c.b16 %v722, %v721
    %v734 = vpack.c.b16 %v724, %v723
    %v735 = vpack.c.b16 %v726, %v725
    %v736 = vpack.c.b16 %v728, %v727
    %745 = vmatprep.subr.bf16.mxu0 0
    %746 = vmatpush1.bf16.msra.mxu0 %v736
    %747 = vmatprep.subr.bf16.mxu0 0
    %748 = vmatpush1.bf16.msra.mxu0 %v735
    %749 = vmatprep.subr.bf16.mxu0 0
    %750 = vmatpush1.bf16.msra.mxu0 %v734
    %751 = vmatprep.subr.bf16.mxu0 0
    %752 = vmatpush1.bf16.msra.mxu0 %v733
    %753 = vmatprep.subr.bf16.mxu0 0
    %754 = vmatpush1.bf16.msra.mxu0 %v732
    %755 = vmatprep.subr.bf16.mxu0 0
    %756 = vmatpush1.bf16.msra.mxu0 %v731
    %757 = vmatprep.subr.bf16.mxu0 0
    %758 = vmatpush1.bf16.msra.mxu0 %v730
    %759 = vmatprep.subr.bf16.mxu0 0
    %760 = vmatpush1.bf16.msra.mxu0 %v729
    %761 = vmatprep.subr.bf16.mxu0 0
    %762 = vmatpush2.bf16.msra.mxu0 0
    %763 = vmatprep.subr.bf16.mxu0 0
    %764 = vmatpush2.bf16.msra.mxu0 0
    %765 = vmatprep.subr.bf16.mxu0 0
    %766 = vmatpush2.bf16.msra.mxu0 0
    %767 = vmatprep.subr.bf16.mxu0 0
    %768 = vmatpush2.bf16.msra.mxu0 0
    %769 = vmatprep.subr.bf16.mxu0 0
    %770 = vmatpush2.bf16.msra.mxu0 0
    %771 = vmatprep.subr.bf16.mxu0 0
    %772 = vmatpush2.bf16.msra.mxu0 0
    %773 = vmatprep.subr.bf16.mxu0 0
    %774 = vmatpush2.bf16.msra.mxu0 0
    %775 = vmatprep.subr.bf16.mxu0 0
    %776 = vmatpush2.bf16.msra.mxu0 0
    %777 = vmatprep.mubr.bf16.mxu0 0
    %778 = vmatmul.mubr.bf16.gmra.mxu0 %v678
    %v779 = vpop.f32.mrf.mxu0
    %v780 = vadd.f32 0.0, %v779
    %v781 = vpop.f32.mrf.mxu0
    %v782 = vpop.f32.mrf.mxu0
    %v783 = vadd.f32 0.0, %v782
    %v784 = vpop.f32.mrf.mxu0
    %785 = vmatprep.mubr.bf16.mxu0 0
    %786 = vmatmul.mubr.bf16.gmra.mxu0 %v679
    %v787 = vpop.f32.mrf.mxu0
    %v788 = vadd.f32 0.0, %v787
    %v789 = vpop.f32.mrf.mxu0
    %v790 = vpop.f32.mrf.mxu0
    %v791 = vadd.f32 0.0, %v790
    %v792 = vpop.f32.mrf.mxu0
    %793 = vdwg.mxu0
    %v794 = vadd.f32 %v660, %v780
    %v795 = vadd.f32 %v663, %v783
    %v796 = vadd.f32 %v668, %v788
    %v797 = vadd.f32 %v671, %v791
    %v798 = vld [vmem:[%s4] sm:$0x1]
    %v800 = vlaneseq
    %v801 = vshrl.u32 %v800, 7
    %v802 = vsub.s32 0, %v801
    %v803 = vrot.slane %v798, %v802
    %v805 = vadd.f32 %v794, %v803
    %v806 = vadd.f32 %v795, %v803
    %v807 = vadd.f32 %v796, %v803
    %v808 = vadd.f32 %v797, %v803
    %v809 = vmax.f32 %v805, 0.0
    %v810 = vmax.f32 %v806, 0.0
    %v811 = vmax.f32 %v807, 0.0
    %v812 = vmax.f32 %v808, 0.0
    %813 = vst [vmem:[%s5] sm:$0xff] %v809
    %814 = vst [vmem:[%s5 + $0x8] sm:$0xff] %v810
    %815 = vst [vmem:[%s5 + $0x10] sm:$0xff] %v811
    %816 = vst [vmem:[%s5 + $0x18] sm:$0xff] %v812
    // Predicated region
    $region30: #{temporal_block_forward.1} parent=1 // pred_check
      _
    $region31: #{temporal_block_forward.1} parent=1 // pred_check_branch
      %818 = sbr.rel (0) target = $region33
    $region32: #{temporal_block_forward.1} parent=1 // pred_region
      _
    $region33: #{temporal_block_forward.1} parent=1 // pred_fallthru
      _
    // Predicated region
    $region34: #{temporal_block_forward.1} parent=1 // pred_check
      _
    $region35: #{temporal_block_forward.1} parent=1 // pred_check_branch
      %820 = sbr.rel (0) target = $region37
    $region36: #{temporal_block_forward.1} parent=1 // pred_region
      _
    $region37: #{temporal_block_forward.1} parent=1 // pred_fallthru
      _
    %821 = vsyncpa [#allocation4], 1
    %822 = vsyncpa [#allocation6], 1

</llo_original>
